<compile_context>
chip_gen: v6e
topology: v6e:2x2x1
jax: 0.10.0
libtpu: 0.0.40
codegen_flags: <defaults>
</compile_context>

<pallas_src>
import jax
import jax.numpy as jnp
from jax.experimental import pallas as pl
from jax.experimental.pallas import tpu as pltpu


def vae_kernel(x_ref, eps_ref,
               we_ref, be_ref,
               wh_ref, bh_ref,
               wd_ref, bd_ref,
               wo_ref, bo_ref,
               out_ref):
    """Fused VAE forward for one (TB, x_pad) batch tile.

    Matmuls: bf16 operands, f32 accumulation on the MXU.
    Elementwise (bias, ReLU, reparameterization, sigmoid): f32.
    """
    x = x_ref[...]

    # ---- Encoder hidden layer: Linear + ReLU ----
    h = jnp.dot(x.astype(jnp.bfloat16), we_ref[...],
                preferred_element_type=jnp.float32) + be_ref[...]
    h = jnp.maximum(h, 0.0)

    # ---- Fused GaussianSample heads: one matmul, slice mu|logvar ----
    head = jnp.dot(h.astype(jnp.bfloat16), wh_ref[...],
                   preferred_element_type=jnp.float32) + bh_ref[...]
    zp = head.shape[-1] // 2          # z_pad, a multiple of 128 -> lane-aligned slices
    mu = head[:, :zp]
    logvar = head[:, zp:]

    # ---- Reparameterization: z = mu + eps * exp(0.5 * logvar) ----
    z = mu + eps_ref[...] * jnp.exp(0.5 * logvar)

    # ---- Decoder hidden layer: Linear + ReLU ----
    d = jnp.dot(z.astype(jnp.bfloat16), wd_ref[...],
                preferred_element_type=jnp.float32) + bd_ref[...]
    d = jnp.maximum(d, 0.0)

    # ---- Output layer: Linear + Sigmoid (binary=True) ----
    logits = jnp.dot(d.astype(jnp.bfloat16), wo_ref[...],
                     preferred_element_type=jnp.float32) + bo_ref[...]
    out_ref[...] = jax.nn.sigmoid(logits)


def _round_up(n, m):
    return ((n + m - 1) // m) * m


def _pad2d(a, rows, cols):
    return jnp.pad(a, ((0, rows - a.shape[0]), (0, cols - a.shape[1])))


def vae_forward(x, eps, params, *, tb=128):
    """Pad everything lane-dense, fuse the mu/logvar heads, tile over batch."""
    we, be, wmu, bmu, wlv, blv, wd, bd, wo, bo = params
    B, x_dim = x.shape
    enc_dim = we.shape[1]
    z_dim = wmu.shape[1]
    dec_dim = wd.shape[1]

    xp = _round_up(x_dim, 128)
    ep = _round_up(enc_dim, 128)
    zp = _round_up(z_dim, 128)
    dp = _round_up(dec_dim, 128)
    bp = _round_up(B, tb)

    # Zero-pad inputs / weights; bf16 for matmul operands, f32 for biases.
    x_p = _pad2d(x, bp, xp)
    eps_p = _pad2d(eps, bp, zp)
    we_p = _pad2d(we, xp, ep).astype(jnp.bfloat16)
    be_p = _pad2d(be, 1, ep)
    # Fused mu|logvar head weight: (enc_pad, 2*z_pad)
    wh_p = jnp.concatenate([_pad2d(wmu, ep, zp), _pad2d(wlv, ep, zp)],
                           axis=1).astype(jnp.bfloat16)
    bh_p = jnp.concatenate([_pad2d(bmu, 1, zp), _pad2d(blv, 1, zp)], axis=1)
    wd_p = _pad2d(wd, zp, dp).astype(jnp.bfloat16)
    bd_p = _pad2d(bd, 1, dp)
    wo_p = _pad2d(wo, dp, xp).astype(jnp.bfloat16)
    bo_p = _pad2d(bo, 1, xp)

    def row_spec(width):
        # Batch-tiled operands: block index advances with the grid step.
        return pl.BlockSpec((tb, width), lambda i: (i, 0))

    def full_spec(shape):
        # Weights / biases: same full-array block for every grid step (stay resident).
        return pl.BlockSpec(shape, lambda i: (0, 0))

    grid = (bp // tb,)
    out = pl.pallas_call(
        vae_kernel,
        out_shape=jax.ShapeDtypeStruct((bp, xp), jnp.float32),
        grid=grid,
        in_specs=[
            row_spec(xp),            # x
            row_spec(zp),            # eps
            full_spec(we_p.shape), full_spec(be_p.shape),
            full_spec(wh_p.shape), full_spec(bh_p.shape),
            full_spec(wd_p.shape), full_spec(bd_p.shape),
            full_spec(wo_p.shape), full_spec(bo_p.shape),
        ],
        out_specs=row_spec(xp),
        compiler_params=pltpu.CompilerParams(
            # Batch tiles are independent -> shard across TCs on megacore parts.
            dimension_semantics=("parallel",),
            # NOTE: at real VAE sizes, set vmem_limit_bytes explicitly and
            # re-derive tb for v7x's 64 MiB VMEM.
        ),
    )(x_p, eps_p, we_p, be_p, wh_p, bh_p, wd_p, bd_p, wo_p, bo_p)

    return out[:B, :x_dim]


def xavier_normal(key, fan_in, fan_out):
    # matches torch.nn.init.xavier_normal_ (gain=1): std = sqrt(2/(fan_in+fan_out))
    std = (2.0 / (fan_in + fan_out)) ** 0.5
    return std * jax.random.normal(key, (fan_in, fan_out), dtype=jnp.float32)


def init_params(key, x_dim, enc_dim, z_dim, dec_dim):
    ks = jax.random.split(key, 5)
    we = xavier_normal(ks[0], x_dim, enc_dim)
    be = jnp.zeros((1, enc_dim), jnp.float32)
    wmu = xavier_normal(ks[1], enc_dim, z_dim)
    bmu = jnp.zeros((1, z_dim), jnp.float32)
    wlv = xavier_normal(ks[2], enc_dim, z_dim)
    blv = jnp.zeros((1, z_dim), jnp.float32)
    wd = xavier_normal(ks[3], z_dim, dec_dim)
    bd = jnp.zeros((1, dec_dim), jnp.float32)
    wo = xavier_normal(ks[4], dec_dim, x_dim)
    bo = jnp.zeros((1, x_dim), jnp.float32)
    return (we, be, wmu, bmu, wlv, blv, wd, bd, wo, bo)


if __name__ == "__main__":
    # dims = [x_dim, z_dim, encode_dim, decode_dim] (single hidden layer each)
    B, x_dim, z_dim, enc_dim, dec_dim = 8, 32, 16, 64, 64
    # TODO(synk): bn/dropout are off in this config (bn=False, dropout=0); not emitted.

    key = jax.random.PRNGKey(0)
    k_x, k_eps, k_p = jax.random.split(key, 3)

    x = jax.random.uniform(k_x, (B, x_dim), dtype=jnp.float32)      # binary-ish input in [0,1)
    eps = jax.random.normal(k_eps, (B, z_dim), dtype=jnp.float32)   # reparameterization noise
    params = init_params(k_p, x_dim, enc_dim, z_dim, dec_dim)

    recon_x = vae_forward(x, eps, params)
    recon_x = jax.block_until_ready(recon_x)

    # --- Pure-JAX references ---
    we, be, wmu, bmu, wlv, blv, wd, bd, wo, bo = params

    def _dot_bf16(a, w):
        return jnp.dot(a.astype(jnp.bfloat16), w.astype(jnp.bfloat16),
                       preferred_element_type=jnp.float32)

    # Reference with matching bf16-operand matmuls (tight tolerance).
    h = jnp.maximum(_dot_bf16(x, we) + be, 0.0)
    mu = _dot_bf16(h, wmu) + bmu
    logvar = _dot_bf16(h, wlv) + blv
    z = mu + eps * jnp.exp(0.5 * logvar)
    d = jnp.maximum(_dot_bf16(z, wd) + bd, 0.0)
    ref_bf16 = jax.nn.sigmoid(_dot_bf16(d, wo) + bo)

    # Full-f32 reference (semantics check; looser tol due to bf16 matmul operands).
    h32 = jnp.maximum(x @ we + be, 0.0)
    mu32 = h32 @ wmu + bmu
    lv32 = h32 @ wlv + blv
    z32 = mu32 + eps * jnp.exp(0.5 * lv32)
    d32 = jnp.maximum(z32 @ wd + bd, 0.0)
    ref_f32 = jax.nn.sigmoid(d32 @ wo + bo)

    assert recon_x.shape == (B, x_dim)
    assert jnp.allclose(recon_x, ref_bf16, atol=1e-4, rtol=1e-4)
    assert jnp.allclose(recon_x, ref_f32, atol=5e-3, rtol=5e-3)
    print("KERNEL_OK")
</pallas_src>

<mosaic_0001>
module attributes {stable_mosaic.version = 11 : i64} {
  func.func @vae_kernel(%arg0: i32, %arg1: memref<128x128xf32, #tpu.memory_space<vmem>>, %arg2: memref<128x128xf32, #tpu.memory_space<vmem>>, %arg3: memref<128x128xbf16, #tpu.memory_space<vmem>>, %arg4: memref<1x128xf32, #tpu.memory_space<vmem>>, %arg5: memref<128x256xbf16, #tpu.memory_space<vmem>>, %arg6: memref<1x256xf32, #tpu.memory_space<vmem>>, %arg7: memref<128x128xbf16, #tpu.memory_space<vmem>>, %arg8: memref<1x128xf32, #tpu.memory_space<vmem>>, %arg9: memref<128x128xbf16, #tpu.memory_space<vmem>>, %arg10: memref<1x128xf32, #tpu.memory_space<vmem>>, %arg11: memref<128x128xf32, #tpu.memory_space<vmem>>) attributes {dimension_semantics = [#tpu.dimension_semantics<parallel>], iteration_bounds = array<i64: 1>, scalar_prefetch = 0 : i64, scratch_operands = 0 : i64, tpu.core_type = #tpu.core_type<tc>, window_params = [{transform_indices = @transform_0, window_bounds = array<i64: 128, 128>}, {transform_indices = @transform_1, window_bounds = array<i64: 128, 128>}, {pipeline_mode = #tpu.pipeline_mode<synchronous>, transform_indices = @transform_2, window_bounds = array<i64: 128, 128>}, {pipeline_mode = #tpu.pipeline_mode<synchronous>, transform_indices = @transform_3, window_bounds = array<i64: 1, 128>}, {pipeline_mode = #tpu.pipeline_mode<synchronous>, transform_indices = @transform_4, window_bounds = array<i64: 128, 256>}, {pipeline_mode = #tpu.pipeline_mode<synchronous>, transform_indices = @transform_5, window_bounds = array<i64: 1, 256>}, {pipeline_mode = #tpu.pipeline_mode<synchronous>, transform_indices = @transform_6, window_bounds = array<i64: 128, 128>}, {pipeline_mode = #tpu.pipeline_mode<synchronous>, transform_indices = @transform_7, window_bounds = array<i64: 1, 128>}, {pipeline_mode = #tpu.pipeline_mode<synchronous>, transform_indices = @transform_8, window_bounds = array<i64: 128, 128>}, {pipeline_mode = #tpu.pipeline_mode<synchronous>, transform_indices = @transform_9, window_bounds = array<i64: 1, 128>}, {transform_indices = @transform_10, window_bounds = array<i64: 128, 128>}]} {
    %c0 = arith.constant 0 : index
    %c0_0 = arith.constant 0 : index
    %0 = vector.load %arg1[%c0, %c0_0] : memref<128x128xf32, #tpu.memory_space<vmem>>, vector<128x128xf32>
    %1 = arith.truncf %0 : vector<128x128xf32> to vector<128x128xbf16>
    %c0_1 = arith.constant 0 : index
    %c0_2 = arith.constant 0 : index
    %2 = vector.load %arg3[%c0_1, %c0_2] : memref<128x128xbf16, #tpu.memory_space<vmem>>, vector<128x128xbf16>
    %cst = arith.constant dense<0.000000e+00> : vector<128x128xf32>
    %3 = tpu.matmul %1, %2, %cst {dimension_numbers = #tpu.dot_dimension_numbers<[1], [0], [0], [1], [0, 0, 1, 1], [], []>} : vector<128x128xbf16>, vector<128x128xbf16>, vector<128x128xf32> -> vector<128x128xf32>
    %c0_3 = arith.constant 0 : index
    %c0_4 = arith.constant 0 : index
    %4 = vector.load %arg4[%c0_3, %c0_4] : memref<1x128xf32, #tpu.memory_space<vmem>>, vector<1x128xf32>
    %5 = vector.broadcast %4 : vector<1x128xf32> to vector<128x128xf32>
    %6 = arith.addf %3, %5 : vector<128x128xf32>
    %cst_5 = arith.constant 0.000000e+00 : f32
    %7 = vector.broadcast %cst_5 : f32 to vector<128x128xf32>
    %8 = arith.maximumf %6, %7 : vector<128x128xf32>
    %9 = arith.truncf %8 : vector<128x128xf32> to vector<128x128xbf16>
    %c0_6 = arith.constant 0 : index
    %c0_7 = arith.constant 0 : index
    %10 = vector.load %arg5[%c0_6, %c0_7] : memref<128x256xbf16, #tpu.memory_space<vmem>>, vector<128x256xbf16>
    %cst_8 = arith.constant dense<0.000000e+00> : vector<128x256xf32>
    %11 = tpu.matmul %9, %10, %cst_8 {dimension_numbers = #tpu.dot_dimension_numbers<[1], [0], [0], [1], [0, 0, 1, 1], [], []>} : vector<128x128xbf16>, vector<128x256xbf16>, vector<128x256xf32> -> vector<128x256xf32>
    %c0_9 = arith.constant 0 : index
    %c0_10 = arith.constant 0 : index
    %12 = vector.load %arg6[%c0_9, %c0_10] : memref<1x256xf32, #tpu.memory_space<vmem>>, vector<1x256xf32>
    %13 = vector.broadcast %12 : vector<1x256xf32> to vector<128x256xf32>
    %14 = arith.addf %11, %13 : vector<128x256xf32>
    %15 = vector.extract_strided_slice %14 {offsets = [0, 0], sizes = [128, 128], strides = [1, 1]} : vector<128x256xf32> to vector<128x128xf32>
    %16 = vector.extract_strided_slice %14 {offsets = [0, 128], sizes = [128, 128], strides = [1, 1]} : vector<128x256xf32> to vector<128x128xf32>
    %c0_11 = arith.constant 0 : index
    %c0_12 = arith.constant 0 : index
    %17 = vector.load %arg2[%c0_11, %c0_12] : memref<128x128xf32, #tpu.memory_space<vmem>>, vector<128x128xf32>
    %cst_13 = arith.constant 5.000000e-01 : f32
    %18 = vector.broadcast %cst_13 : f32 to vector<128x128xf32>
    %19 = arith.mulf %18, %16 : vector<128x128xf32>
    %20 = math.exp %19 : vector<128x128xf32>
    %21 = arith.mulf %17, %20 : vector<128x128xf32>
    %22 = arith.addf %15, %21 : vector<128x128xf32>
    %23 = arith.truncf %22 : vector<128x128xf32> to vector<128x128xbf16>
    %c0_14 = arith.constant 0 : index
    %c0_15 = arith.constant 0 : index
    %24 = vector.load %arg7[%c0_14, %c0_15] : memref<128x128xbf16, #tpu.memory_space<vmem>>, vector<128x128xbf16>
    %cst_16 = arith.constant dense<0.000000e+00> : vector<128x128xf32>
    %25 = tpu.matmul %23, %24, %cst_16 {dimension_numbers = #tpu.dot_dimension_numbers<[1], [0], [0], [1], [0, 0, 1, 1], [], []>} : vector<128x128xbf16>, vector<128x128xbf16>, vector<128x128xf32> -> vector<128x128xf32>
    %c0_17 = arith.constant 0 : index
    %c0_18 = arith.constant 0 : index
    %26 = vector.load %arg8[%c0_17, %c0_18] : memref<1x128xf32, #tpu.memory_space<vmem>>, vector<1x128xf32>
    %27 = vector.broadcast %26 : vector<1x128xf32> to vector<128x128xf32>
    %28 = arith.addf %25, %27 : vector<128x128xf32>
    %cst_19 = arith.constant 0.000000e+00 : f32
    %29 = vector.broadcast %cst_19 : f32 to vector<128x128xf32>
    %30 = arith.maximumf %28, %29 : vector<128x128xf32>
    %31 = arith.truncf %30 : vector<128x128xf32> to vector<128x128xbf16>
    %c0_20 = arith.constant 0 : index
    %c0_21 = arith.constant 0 : index
    %32 = vector.load %arg9[%c0_20, %c0_21] : memref<128x128xbf16, #tpu.memory_space<vmem>>, vector<128x128xbf16>
    %cst_22 = arith.constant dense<0.000000e+00> : vector<128x128xf32>
    %33 = tpu.matmul %31, %32, %cst_22 {dimension_numbers = #tpu.dot_dimension_numbers<[1], [0], [0], [1], [0, 0, 1, 1], [], []>} : vector<128x128xbf16>, vector<128x128xbf16>, vector<128x128xf32> -> vector<128x128xf32>
    %c0_23 = arith.constant 0 : index
    %c0_24 = arith.constant 0 : index
    %34 = vector.load %arg10[%c0_23, %c0_24] : memref<1x128xf32, #tpu.memory_space<vmem>>, vector<1x128xf32>
    %35 = vector.broadcast %34 : vector<1x128xf32> to vector<128x128xf32>
    %36 = arith.addf %33, %35 : vector<128x128xf32>
    %37 = arith.negf %36 : vector<128x128xf32>
    %38 = math.exp %37 : vector<128x128xf32>
    %cst_25 = arith.constant 1.000000e+00 : f32
    %39 = vector.broadcast %cst_25 : f32 to vector<128x128xf32>
    %40 = arith.addf %39, %38 : vector<128x128xf32>
    %41 = arith.divf %39, %40 : vector<128x128xf32>
    %c0_26 = arith.constant 0 : index
    %c0_27 = arith.constant 0 : index
    %42 = vector.load %arg11[%c0_26, %c0_27] : memref<128x128xf32, #tpu.memory_space<vmem>>, vector<128x128xf32>
    tpu.vector_store %arg11[%c0_26, %c0_27], %41 {strides = array<i32>} : memref<128x128xf32, #tpu.memory_space<vmem>>, vector<128x128xf32>,
    return
  }
  func.func @transform_0(%arg0: i32) -> (i32, i32) {
    %c0_i32 = arith.constant 0 : i32
    %c0_i32_0 = arith.constant 0 : i32
    return %arg0, %c0_i32 : i32, i32
  }
  func.func @transform_1(%arg0: i32) -> (i32, i32) {
    %c0_i32 = arith.constant 0 : i32
    %c0_i32_0 = arith.constant 0 : i32
    return %arg0, %c0_i32 : i32, i32
  }
  func.func @transform_2(%arg0: i32) -> (i32, i32) {
    %c0_i32 = arith.constant 0 : i32
    %c0_i32_0 = arith.constant 0 : i32
    %c0_i32_1 = arith.constant 0 : i32
    return %c0_i32, %c0_i32_0 : i32, i32
  }
  func.func @transform_3(%arg0: i32) -> (i32, i32) {
    %c0_i32 = arith.constant 0 : i32
    %c0_i32_0 = arith.constant 0 : i32
    %c0_i32_1 = arith.constant 0 : i32
    return %c0_i32, %c0_i32_0 : i32, i32
  }
  func.func @transform_4(%arg0: i32) -> (i32, i32) {
    %c0_i32 = arith.constant 0 : i32
    %c0_i32_0 = arith.constant 0 : i32
    %c0_i32_1 = arith.constant 0 : i32
    return %c0_i32, %c0_i32_0 : i32, i32
  }
  func.func @transform_5(%arg0: i32) -> (i32, i32) {
    %c0_i32 = arith.constant 0 : i32
    %c0_i32_0 = arith.constant 0 : i32
    %c0_i32_1 = arith.constant 0 : i32
    return %c0_i32, %c0_i32_0 : i32, i32
  }
  func.func @transform_6(%arg0: i32) -> (i32, i32) {
    %c0_i32 = arith.constant 0 : i32
    %c0_i32_0 = arith.constant 0 : i32
    %c0_i32_1 = arith.constant 0 : i32
    return %c0_i32, %c0_i32_0 : i32, i32
  }
  func.func @transform_7(%arg0: i32) -> (i32, i32) {
    %c0_i32 = arith.constant 0 : i32
    %c0_i32_0 = arith.constant 0 : i32
    %c0_i32_1 = arith.constant 0 : i32
    return %c0_i32, %c0_i32_0 : i32, i32
  }
  func.func @transform_8(%arg0: i32) -> (i32, i32) {
    %c0_i32 = arith.constant 0 : i32
    %c0_i32_0 = arith.constant 0 : i32
    %c0_i32_1 = arith.constant 0 : i32
    return %c0_i32, %c0_i32_0 : i32, i32
  }
  func.func @transform_9(%arg0: i32) -> (i32, i32) {
    %c0_i32 = arith.constant 0 : i32
    %c0_i32_0 = arith.constant 0 : i32
    %c0_i32_1 = arith.constant 0 : i32
    return %c0_i32, %c0_i32_0 : i32, i32
  }
  func.func @transform_10(%arg0: i32) -> (i32, i32) {
    %c0_i32 = arith.constant 0 : i32
    %c0_i32_0 = arith.constant 0 : i32
    return %arg0, %c0_i32 : i32, i32
  }
}

</mosaic_0001>

<llo_original>
// kernel: tpu_custom_call.1
$region0: #{tpu_custom_call.1}
  #allocation0 [shape = 'u32[]', space=smem, size = 0x4, offset = 0x4, fixed_abs, tag = 'smem constant byte address 0x4 - core index']
  #allocation1 [shape = 'u32[144,128]{1,0:T(1,128)}', space=vmem, size = 0x12000, scoped, tag = 'internal scratch']
  %s0 = inlined_call_operand.hbm [shape: f32[128,128], index: 0, kind: input, shape index: {}]
  %s1 = inlined_call_operand.hbm [shape: f32[128,128], index: 1, kind: input, shape index: {}]
  %s2 = inlined_call_operand.hbm [shape: bf16[128,128], index: 2, kind: input, shape index: {}]
  %s3 = inlined_call_operand.vmem [shape: f32[1,128], index: 3, kind: input, shape index: {}]
  %s4 = inlined_call_operand.hbm [shape: bf16[128,256], index: 4, kind: input, shape index: {}]
  %s5 = inlined_call_operand.vmem [shape: f32[1,256], index: 5, kind: input, shape index: {}]
  %s6 = inlined_call_operand.hbm [shape: bf16[128,128], index: 6, kind: input, shape index: {}]
  %s7 = inlined_call_operand.vmem [shape: f32[1,128], index: 7, kind: input, shape index: {}]
  %s8 = inlined_call_operand.hbm [shape: bf16[128,128], index: 8, kind: input, shape index: {}]
  %s9 = inlined_call_operand.vmem [shape: f32[1,128], index: 9, kind: input, shape index: {}]
  %s10 = inlined_call_operand.hbm [shape: f32[128,128], index: 10, kind: output, shape index: {}]
  %s11 = sld [smem:[#allocation0]]
  $region74: #{tpu_custom_call.1} parent=0
    _
  %s13 = ssub.s32 1, %s11
  %s14 = scalar_select 0, %s13, %s11
  $region1: #{tpu_custom_call.1} parent=0
    #allocation2 [shape = 'u8[65536]{0}', space=vmem, size = 0x10000, scoped, tag = 'input window, operand 0, single buffered']
    #allocation3 [shape = 's32[1]{0}', space=sflag, size = 0x4, scoped, tag = 'scoped memory for tpu_custom_call.1']
    #allocation4 [shape = 's32[1]{0}', space=sflag, size = 0x4, scoped, tag = 'scoped memory for tpu_custom_call.1']
    #allocation5 [shape = 'u8[65536]{0}', space=vmem, size = 0x10000, scoped, tag = 'input window, operand 1, single buffered']
    #allocation6 [shape = 's32[1]{0}', space=sflag, size = 0x4, scoped, tag = 'scoped memory for tpu_custom_call.1']
    #allocation7 [shape = 'u8[32768]{0}', space=vmem, size = 0x8000, scoped, tag = 'input window, operand 2, single buffered']
    #allocation8 [shape = 'u8[65536]{0}', space=vmem, size = 0x10000, scoped, tag = 'input window, operand 4, single buffered']
    #allocation9 [shape = 's32[1]{0}', space=sflag, size = 0x4, scoped, tag = 'scoped memory for tpu_custom_call.1']
    #allocation10 [shape = 'u8[32768]{0}', space=vmem, size = 0x8000, scoped, tag = 'input window, operand 6, single buffered']
    #allocation11 [shape = 'u8[32768]{0}', space=vmem, size = 0x8000, scoped, tag = 'input window, operand 8, single buffered']
    #allocation12 [shape = 's32[1]{0}', space=sflag, size = 0x4, scoped, tag = 'scoped memory for tpu_custom_call.1']
    #allocation13 [shape = 'u8[65536]{0}', space=vmem, size = 0x10000, scoped, tag = 'output window, operand 0, single buffered']
    %15 = vsyncpa [#allocation3], 0
    %16 = vsyncpa [#allocation6], 0
    %17 = vsyncpa [#allocation9], 0
    %18 = vsyncpa [#allocation12], 0
    %19 = vsyncpa [#allocation4], 0
    // Predicated region
    $region2: #{tpu_custom_call.1} parent=1 // pred_check
      _
    $region3: #{tpu_custom_call.1} parent=1 // pred_check_branch
      %21 = sbr.rel (0) target = $region5
    $region4: #{tpu_custom_call.1} parent=1 // pred_region
      %s23 = ssub.s32 2048, 2048
      %24 = vsyncadd [#allocation3], %s23
      %s25 = sshll.u32 [#allocation2], 4
      %s26 = int_to_ptr.vmem [resolvable:$true] %s25
      %31 = dma.hbm_to_vmem [thread:$0]  %s0, 2048, %s26, [#allocation3], 128, 128, 8
    $region5: #{tpu_custom_call.1} parent=1 // pred_fallthru
      _
    // Predicated region
    $region6: #{tpu_custom_call.1} parent=1 // pred_check
      _
    $region7: #{tpu_custom_call.1} parent=1 // pred_check_branch
      %33 = sbr.rel (0) target = $region9
    $region8: #{tpu_custom_call.1} parent=1 // pred_region
      %s35 = ssub.s32 2048, 2048
      %36 = vsyncadd [#allocation6], %s35
      %s37 = sshll.u32 [#allocation5], 4
      %s38 = int_to_ptr.vmem [resolvable:$true] %s37
      %43 = dma.hbm_to_vmem [thread:$0]  %s1, 2048, %s38, [#allocation6], 128, 128, 8
    $region9: #{tpu_custom_call.1} parent=1 // pred_fallthru
      _
    // Predicated region
    $region10: #{tpu_custom_call.1} parent=1 // pred_check
      _
    $region11: #{tpu_custom_call.1} parent=1 // pred_check_branch
      %45 = sbr.rel (0) target = $region13
    $region12: #{tpu_custom_call.1} parent=1 // pred_region
      %s47 = ssub.s32 1024, 1024
      %48 = vsyncadd [#allocation6], %s47
      %s49 = sshll.u32 [#allocation7], 4
      %s50 = int_to_ptr.vmem [resolvable:$true] %s49
      %55 = dma.hbm_to_vmem [thread:$0]  %s2, 1024, %s50, [#allocation6], 64, 64, 4
    $region13: #{tpu_custom_call.1} parent=1 // pred_fallthru
      _
    // Predicated region
    $region14: #{tpu_custom_call.1} parent=1 // pred_check
      _
    $region15: #{tpu_custom_call.1} parent=1 // pred_check_branch
      %57 = sbr.rel (0) target = $region17
    $region16: #{tpu_custom_call.1} parent=1 // pred_region
      _
    $region17: #{tpu_custom_call.1} parent=1 // pred_fallthru
      _
    // Predicated region
    $region18: #{tpu_custom_call.1} parent=1 // pred_check
      _
    $region19: #{tpu_custom_call.1} parent=1 // pred_check_branch
      %59 = sbr.rel (0) target = $region21
    $region20: #{tpu_custom_call.1} parent=1 // pred_region
      %s61 = ssub.s32 2048, 2048
      %62 = vsyncadd [#allocation9], %s61
      %s63 = sshll.u32 [#allocation8], 4
      %s64 = int_to_ptr.vmem [resolvable:$true] %s63
      %69 = dma.hbm_to_vmem [thread:$0]  %s4, 2048, %s64, [#allocation9], 128, 128, 8
    $region21: #{tpu_custom_call.1} parent=1 // pred_fallthru
      _
    // Predicated region
    $region22: #{tpu_custom_call.1} parent=1 // pred_check
      _
    $region23: #{tpu_custom_call.1} parent=1 // pred_check_branch
      %71 = sbr.rel (0) target = $region25
    $region24: #{tpu_custom_call.1} parent=1 // pred_region
      _
    $region25: #{tpu_custom_call.1} parent=1 // pred_fallthru
      _
    // Predicated region
    $region26: #{tpu_custom_call.1} parent=1 // pred_check
      _
    $region27: #{tpu_custom_call.1} parent=1 // pred_check_branch
      %73 = sbr.rel (0) target = $region29
    $region28: #{tpu_custom_call.1} parent=1 // pred_region
      %s75 = ssub.s32 1024, 1024
      %76 = vsyncadd [#allocation9], %s75
      %s77 = sshll.u32 [#allocation10], 4
      %s78 = int_to_ptr.vmem [resolvable:$true] %s77
      %83 = dma.hbm_to_vmem [thread:$0]  %s6, 1024, %s78, [#allocation9], 64, 64, 4
    $region29: #{tpu_custom_call.1} parent=1 // pred_fallthru
      _
    // Predicated region
    $region30: #{tpu_custom_call.1} parent=1 // pred_check
      _
    $region31: #{tpu_custom_call.1} parent=1 // pred_check_branch
      %85 = sbr.rel (0) target = $region33
    $region32: #{tpu_custom_call.1} parent=1 // pred_region
      _
    $region33: #{tpu_custom_call.1} parent=1 // pred_fallthru
      _
    // Predicated region
    $region34: #{tpu_custom_call.1} parent=1 // pred_check
      _
    $region35: #{tpu_custom_call.1} parent=1 // pred_check_branch
      %87 = sbr.rel (0) target = $region37
    $region36: #{tpu_custom_call.1} parent=1 // pred_region
      %s89 = ssub.s32 1024, 1024
      %90 = vsyncadd [#allocation12], %s89
      %s91 = sshll.u32 [#allocation11], 4
      %s92 = int_to_ptr.vmem [resolvable:$true] %s91
      %97 = dma.hbm_to_vmem [thread:$0]  %s8, 1024, %s92, [#allocation12], 64, 64, 4
    $region37: #{tpu_custom_call.1} parent=1 // pred_fallthru
      _
    // Predicated region
    $region38: #{tpu_custom_call.1} parent=1 // pred_check
      _
    $region39: #{tpu_custom_call.1} parent=1 // pred_check_branch
      %99 = sbr.rel (0) target = $region41
    $region40: #{tpu_custom_call.1} parent=1 // pred_region
      _
    $region41: #{tpu_custom_call.1} parent=1 // pred_fallthru
      _
    // Predicated region
    $region42: #{tpu_custom_call.1} parent=1 // pred_check
      _
    $region43: #{tpu_custom_call.1} parent=1 // pred_check_branch
      %101 = sbr.rel (0) target = $region45
    $region44: #{tpu_custom_call.1} parent=1 // pred_region
      %102 = dma.done [#allocation3], 2048
    $region45: #{tpu_custom_call.1} parent=1 // pred_fallthru
      _
    // Predicated region
    $region46: #{tpu_custom_call.1} parent=1 // pred_check
      _
    $region47: #{tpu_custom_call.1} parent=1 // pred_check_branch
      %104 = sbr.rel (0) target = $region49
    $region48: #{tpu_custom_call.1} parent=1 // pred_region
      %105 = dma.done [#allocation6], 2048
    $region49: #{tpu_custom_call.1} parent=1 // pred_fallthru
      _
    // Predicated region
    $region50: #{tpu_custom_call.1} parent=1 // pred_check
      _
    $region51: #{tpu_custom_call.1} parent=1 // pred_check_branch
      %107 = sbr.rel (0) target = $region53
    $region52: #{tpu_custom_call.1} parent=1 // pred_region
      %108 = dma.done [#allocation6], 1024
    $region53: #{tpu_custom_call.1} parent=1 // pred_fallthru
      _
    // Predicated region
    $region54: #{tpu_custom_call.1} parent=1 // pred_check
      _
    $region55: #{tpu_custom_call.1} parent=1 // pred_check_branch
      %110 = sbr.rel (0) target = $region57
    $region56: #{tpu_custom_call.1} parent=1 // pred_region
      %111 = dma.done [#allocation9], 2048
    $region57: #{tpu_custom_call.1} parent=1 // pred_fallthru
      _
    // Predicated region
    $region58: #{tpu_custom_call.1} parent=1 // pred_check
      _
    $region59: #{tpu_custom_call.1} parent=1 // pred_check_branch
      %113 = sbr.rel (0) target = $region61
    $region60: #{tpu_custom_call.1} parent=1 // pred_region
      %114 = dma.done [#allocation9], 1024
    $region61: #{tpu_custom_call.1} parent=1 // pred_fallthru
      _
    // Predicated region
    $region62: #{tpu_custom_call.1} parent=1 // pred_check
      _
    $region63: #{tpu_custom_call.1} parent=1 // pred_check_branch
      %116 = sbr.rel (0) target = $region65
    $region64: #{tpu_custom_call.1} parent=1 // pred_region
      %117 = dma.done [#allocation12], 1024
    $region65: #{tpu_custom_call.1} parent=1 // pred_fallthru
      _
    %v119 = vld [vmem:[#allocation2] sm:$0xff]
    %v120 = vld [vmem:[#allocation2 + $0x8] sm:$0xff]
    %v121 = vld [vmem:[#allocation2 + $0x10] sm:$0xff]
    %v122 = vld [vmem:[#allocation2 + $0x18] sm:$0xff]
    %v123 = vld [vmem:[#allocation2 + $0x20] sm:$0xff]
    %v124 = vld [vmem:[#allocation2 + $0x28] sm:$0xff]
    %v125 = vld [vmem:[#allocation2 + $0x30] sm:$0xff]
    %v126 = vld [vmem:[#allocation2 + $0x38] sm:$0xff]
    %v127 = vld [vmem:[#allocation2 + $0x40] sm:$0xff]
    %v128 = vld [vmem:[#allocation2 + $0x48] sm:$0xff]
    %v129 = vld [vmem:[#allocation2 + $0x50] sm:$0xff]
    %v130 = vld [vmem:[#allocation2 + $0x58] sm:$0xff]
    %v131 = vld [vmem:[#allocation2 + $0x60] sm:$0xff]
    %v132 = vld [vmem:[#allocation2 + $0x68] sm:$0xff]
    %v133 = vld [vmem:[#allocation2 + $0x70] sm:$0xff]
    %v134 = vld [vmem:[#allocation2 + $0x78] sm:$0xff]
    %v135 = vpack.c.bf16 %v120, %v119
    %v136 = vpack.c.bf16 %v122, %v121
    %v137 = vpack.c.bf16 %v124, %v123
    %v138 = vpack.c.bf16 %v126, %v125
    %v139 = vpack.c.bf16 %v128, %v127
    %v140 = vpack.c.bf16 %v130, %v129
    %v141 = vpack.c.bf16 %v132, %v131
    %v142 = vpack.c.bf16 %v134, %v133
    %v143 = vld [vmem:[#allocation7] sm:$0xf]
    %v144 = vld [vmem:[#allocation7 + $0x4] sm:$0xf]
    %v145 = vld [vmem:[#allocation7 + $0x8] sm:$0xf]
    %v146 = vld [vmem:[#allocation7 + $0xc] sm:$0xf]
    %v147 = vld [vmem:[#allocation7 + $0x10] sm:$0xf]
    %v148 = vld [vmem:[#allocation7 + $0x14] sm:$0xf]
    %v149 = vld [vmem:[#allocation7 + $0x18] sm:$0xf]
    %v150 = vld [vmem:[#allocation7 + $0x1c] sm:$0xf]
    %v151 = vld [vmem:[#allocation7 + $0x20] sm:$0xf]
    %v152 = vld [vmem:[#allocation7 + $0x24] sm:$0xf]
    %v153 = vld [vmem:[#allocation7 + $0x28] sm:$0xf]
    %v154 = vld [vmem:[#allocation7 + $0x2c] sm:$0xf]
    %v155 = vld [vmem:[#allocation7 + $0x30] sm:$0xf]
    %v156 = vld [vmem:[#allocation7 + $0x34] sm:$0xf]
    %v157 = vld [vmem:[#allocation7 + $0x38] sm:$0xf]
    %v158 = vld [vmem:[#allocation7 + $0x3c] sm:$0xf]
    %v159 = vld [vmem:[%s3] sm:$0x1]
    %v161 = vlaneseq
    %v162 = vshrl.u32 %v161, 7
    %v163 = vsub.s32 0, %v162
    %v164 = vrot.slane %v159, %v163
    %v182 = vunpack.c.l.b16 %v143
    %v183 = vunpack.c.l.b16 %v144
    %v184 = vunpack.c.l.b16 %v145
    %v185 = vunpack.c.l.b16 %v146
    %v186 = vunpack.c.l.b16 %v147
    %v187 = vunpack.c.l.b16 %v148
    %v188 = vunpack.c.l.b16 %v149
    %v189 = vunpack.c.l.b16 %v150
    %v190 = vunpack.c.l.b16 %v151
    %v191 = vunpack.c.l.b16 %v152
    %v192 = vunpack.c.l.b16 %v153
    %v193 = vunpack.c.l.b16 %v154
    %v194 = vunpack.c.l.b16 %v155
    %v195 = vunpack.c.l.b16 %v156
    %v196 = vunpack.c.l.b16 %v157
    %v197 = vunpack.c.l.b16 %v158
    %v198 = vpack.c.b16 %v183, %v182
    %v199 = vpack.c.b16 %v185, %v184
    %v200 = vpack.c.b16 %v187, %v186
    %v201 = vpack.c.b16 %v189, %v188
    %v202 = vpack.c.b16 %v191, %v190
    %v203 = vpack.c.b16 %v193, %v192
    %v204 = vpack.c.b16 %v195, %v194
    %v205 = vpack.c.b16 %v197, %v196
    %214 = vmatprep.subr.bf16.mxu0 0
    %215 = vmatpush1.bf16.msra.mxu0 %v205
    %216 = vmatprep.subr.bf16.mxu0 0
    %217 = vmatpush1.bf16.msra.mxu0 %v204
    %218 = vmatprep.subr.bf16.mxu0 0
    %219 = vmatpush1.bf16.msra.mxu0 %v203
    %220 = vmatprep.subr.bf16.mxu0 0
    %221 = vmatpush1.bf16.msra.mxu0 %v202
    %222 = vmatprep.subr.bf16.mxu0 0
    %223 = vmatpush1.bf16.msra.mxu0 %v201
    %224 = vmatprep.subr.bf16.mxu0 0
    %225 = vmatpush1.bf16.msra.mxu0 %v200
    %226 = vmatprep.subr.bf16.mxu0 0
    %227 = vmatpush1.bf16.msra.mxu0 %v199
    %228 = vmatprep.subr.bf16.mxu0 0
    %229 = vmatpush1.bf16.msra.mxu0 %v198
    %230 = vmatprep.subr.bf16.mxu0 0
    %231 = vmatpush2.bf16.msra.mxu0 0
    %232 = vmatprep.subr.bf16.mxu0 0
    %233 = vmatpush2.bf16.msra.mxu0 0
    %234 = vmatprep.subr.bf16.mxu0 0
    %235 = vmatpush2.bf16.msra.mxu0 0
    %236 = vmatprep.subr.bf16.mxu0 0
    %237 = vmatpush2.bf16.msra.mxu0 0
    %238 = vmatprep.subr.bf16.mxu0 0
    %239 = vmatpush2.bf16.msra.mxu0 0
    %240 = vmatprep.subr.bf16.mxu0 0
    %241 = vmatpush2.bf16.msra.mxu0 0
    %242 = vmatprep.subr.bf16.mxu0 0
    %243 = vmatpush2.bf16.msra.mxu0 0
    %244 = vmatprep.subr.bf16.mxu0 0
    %245 = vmatpush2.bf16.msra.mxu0 0
    %246 = vmatprep.mubr.bf16.mxu0 0
    %247 = vmatmul.mubr.bf16.gmra.mxu0 %v135
    %v248 = vpop.f32.mrf.mxu0
    %v249 = vadd.f32 %v164, %v248
    %v250 = vpop.f32.mrf.mxu0
    %v251 = vpop.f32.mrf.mxu0
    %v252 = vadd.f32 %v164, %v251
    %v253 = vpop.f32.mrf.mxu0
    %254 = vmatprep.mubr.bf16.mxu0 0
    %255 = vmatmul.mubr.bf16.gmra.mxu0 %v136
    %v256 = vpop.f32.mrf.mxu0
    %v257 = vadd.f32 %v164, %v256
    %v258 = vpop.f32.mrf.mxu0
    %v259 = vpop.f32.mrf.mxu0
    %v260 = vadd.f32 %v164, %v259
    %v261 = vpop.f32.mrf.mxu0
    %262 = vmatprep.mubr.bf16.mxu0 0
    %263 = vmatmul.mubr.bf16.gmra.mxu0 %v137
    %v264 = vpop.f32.mrf.mxu0
    %v265 = vadd.f32 %v164, %v264
    %v266 = vpop.f32.mrf.mxu0
    %v267 = vpop.f32.mrf.mxu0
    %v268 = vadd.f32 %v164, %v267
    %v269 = vpop.f32.mrf.mxu0
    %270 = vmatprep.mubr.bf16.mxu0 0
    %271 = vmatmul.mubr.bf16.gmra.mxu0 %v138
    %v272 = vpop.f32.mrf.mxu0
    %v273 = vadd.f32 %v164, %v272
    %v274 = vpop.f32.mrf.mxu0
    %v275 = vpop.f32.mrf.mxu0
    %v276 = vadd.f32 %v164, %v275
    %v277 = vpop.f32.mrf.mxu0
    %278 = vmatprep.mubr.bf16.mxu0 0
    %279 = vmatmul.mubr.bf16.gmra.mxu0 %v139
    %v280 = vpop.f32.mrf.mxu0
    %v281 = vadd.f32 %v164, %v280
    %v282 = vpop.f32.mrf.mxu0
    %v283 = vpop.f32.mrf.mxu0
    %v284 = vadd.f32 %v164, %v283
    %v285 = vpop.f32.mrf.mxu0
    %286 = vmatprep.mubr.bf16.mxu0 0
    %287 = vmatmul.mubr.bf16.gmra.mxu0 %v140
    %v288 = vpop.f32.mrf.mxu0
    %v289 = vadd.f32 %v164, %v288
    %v290 = vpop.f32.mrf.mxu0
    %v291 = vpop.f32.mrf.mxu0
    %v292 = vadd.f32 %v164, %v291
    %v293 = vpop.f32.mrf.mxu0
    %294 = vmatprep.mubr.bf16.mxu0 0
    %295 = vmatmul.mubr.bf16.gmra.mxu0 %v141
    %v296 = vpop.f32.mrf.mxu0
    %v297 = vadd.f32 %v164, %v296
    %v298 = vpop.f32.mrf.mxu0
    %v299 = vpop.f32.mrf.mxu0
    %v300 = vadd.f32 %v164, %v299
    %v301 = vpop.f32.mrf.mxu0
    %302 = vmatprep.mubr.bf16.mxu0 0
    %303 = vmatmul.mubr.bf16.gmra.mxu0 %v142
    %v304 = vpop.f32.mrf.mxu0
    %v305 = vadd.f32 %v164, %v304
    %v306 = vpop.f32.mrf.mxu0
    %v307 = vpop.f32.mrf.mxu0
    %v308 = vadd.f32 %v164, %v307
    %v309 = vpop.f32.mrf.mxu0
    %310 = vdwg.mxu0
    %v311 = vmax.f32 %v249, 0.0
    %v312 = vmax.f32 %v252, 0.0
    %v313 = vmax.f32 %v257, 0.0
    %v314 = vmax.f32 %v260, 0.0
    %v315 = vmax.f32 %v265, 0.0
    %v316 = vmax.f32 %v268, 0.0
    %v317 = vmax.f32 %v273, 0.0
    %v318 = vmax.f32 %v276, 0.0
    %v319 = vmax.f32 %v281, 0.0
    %v320 = vmax.f32 %v284, 0.0
    %v321 = vmax.f32 %v289, 0.0
    %v322 = vmax.f32 %v292, 0.0
    %v323 = vmax.f32 %v297, 0.0
    %v324 = vmax.f32 %v300, 0.0
    %v325 = vmax.f32 %v305, 0.0
    %v326 = vmax.f32 %v308, 0.0
    %v327 = vpack.c.bf16 %v312, %v311
    %v328 = vpack.c.bf16 %v314, %v313
    %v329 = vpack.c.bf16 %v316, %v315
    %v330 = vpack.c.bf16 %v318, %v317
    %v331 = vpack.c.bf16 %v320, %v319
    %v332 = vpack.c.bf16 %v322, %v321
    %v333 = vpack.c.bf16 %v324, %v323
    %v334 = vpack.c.bf16 %v326, %v325
    %v335 = vld [vmem:[#allocation8] sm:$0xff]
    %v336 = vld [vmem:[#allocation8 + $0x8] sm:$0xff]
    %v337 = vld [vmem:[#allocation8 + $0x10] sm:$0xff]
    %v338 = vld [vmem:[#allocation8 + $0x18] sm:$0xff]
    %v339 = vld [vmem:[#allocation8 + $0x20] sm:$0xff]
    %v340 = vld [vmem:[#allocation8 + $0x28] sm:$0xff]
    %v341 = vld [vmem:[#allocation8 + $0x30] sm:$0xff]
    %v342 = vld [vmem:[#allocation8 + $0x38] sm:$0xff]
    %v343 = vld [vmem:[#allocation8 + $0x40] sm:$0xff]
    %v344 = vld [vmem:[#allocation8 + $0x48] sm:$0xff]
    %v345 = vld [vmem:[#allocation8 + $0x50] sm:$0xff]
    %v346 = vld [vmem:[#allocation8 + $0x58] sm:$0xff]
    %v347 = vld [vmem:[#allocation8 + $0x60] sm:$0xff]
    %v348 = vld [vmem:[#allocation8 + $0x68] sm:$0xff]
    %v349 = vld [vmem:[#allocation8 + $0x70] sm:$0xff]
    %v350 = vld [vmem:[#allocation8 + $0x78] sm:$0xff]
    %v351 = vld [vmem:[%s5] sm:$0x3]
    %v353 = vlaneseq
    %v354 = vshrl.u32 %v353, 7
    %v355 = vsub.s32 0, %v354
    %v356 = vrot.slane %v351, %v355
    %v357 = vlaneseq
    %v358 = vshrl.u32 %v357, 7
    %v359 = vsub.s32 1, %v358
    %v360 = vrot.slane %v351, %v359
    %v379 = vunpack.c.l.b16 %v335
    %v380 = vunpack.c.h.b16 %v335
    %v381 = vunpack.c.l.b16 %v336
    %v382 = vunpack.c.h.b16 %v336
    %v383 = vunpack.c.l.b16 %v337
    %v384 = vunpack.c.h.b16 %v337
    %v385 = vunpack.c.l.b16 %v338
    %v386 = vunpack.c.h.b16 %v338
    %v387 = vunpack.c.l.b16 %v339
    %v388 = vunpack.c.h.b16 %v339
    %v389 = vunpack.c.l.b16 %v340
    %v390 = vunpack.c.h.b16 %v340
    %v391 = vunpack.c.l.b16 %v341
    %v392 = vunpack.c.h.b16 %v341
    %v393 = vunpack.c.l.b16 %v342
    %v394 = vunpack.c.h.b16 %v342
    %v395 = vunpack.c.l.b16 %v343
    %v396 = vunpack.c.h.b16 %v343
    %v397 = vunpack.c.l.b16 %v344
    %v398 = vunpack.c.h.b16 %v344
    %v399 = vunpack.c.l.b16 %v345
    %v400 = vunpack.c.h.b16 %v345
    %v401 = vunpack.c.l.b16 %v346
    %v402 = vunpack.c.h.b16 %v346
    %v403 = vunpack.c.l.b16 %v347
    %v404 = vunpack.c.h.b16 %v347
    %v405 = vunpack.c.l.b16 %v348
    %v406 = vunpack.c.h.b16 %v348
    %v407 = vunpack.c.l.b16 %v349
    %v408 = vunpack.c.h.b16 %v349
    %v409 = vunpack.c.l.b16 %v350
    %v410 = vunpack.c.h.b16 %v350
    %v411 = vpack.c.b16 %v381, %v379
    %v412 = vpack.c.b16 %v382, %v380
    %v413 = vpack.c.b16 %v385, %v383
    %v414 = vpack.c.b16 %v386, %v384
    %v415 = vpack.c.b16 %v389, %v387
    %v416 = vpack.c.b16 %v390, %v388
    %v417 = vpack.c.b16 %v393, %v391
    %v418 = vpack.c.b16 %v394, %v392
    %v419 = vpack.c.b16 %v397, %v395
    %v420 = vpack.c.b16 %v398, %v396
    %v421 = vpack.c.b16 %v401, %v399
    %v422 = vpack.c.b16 %v402, %v400
    %v423 = vpack.c.b16 %v405, %v403
    %v424 = vpack.c.b16 %v406, %v404
    %v425 = vpack.c.b16 %v409, %v407
    %v426 = vpack.c.b16 %v410, %v408
    %443 = vmatprep.subr.bf16.mxu0 %v426
    %444 = vmatpush1.bf16.msra.mxu0 %v425
    %445 = vmatprep.subr.bf16.mxu0 %v424
    %446 = vmatpush1.bf16.msra.mxu0 %v423
    %447 = vmatprep.subr.bf16.mxu0 %v422
    %448 = vmatpush1.bf16.msra.mxu0 %v421
    %449 = vmatprep.subr.bf16.mxu0 %v420
    %450 = vmatpush1.bf16.msra.mxu0 %v419
    %451 = vmatprep.subr.bf16.mxu0 %v418
    %452 = vmatpush1.bf16.msra.mxu0 %v417
    %453 = vmatprep.subr.bf16.mxu0 %v416
    %454 = vmatpush1.bf16.msra.mxu0 %v415
    %455 = vmatprep.subr.bf16.mxu0 %v414
    %456 = vmatpush1.bf16.msra.mxu0 %v413
    %457 = vmatprep.subr.bf16.mxu0 %v412
    %458 = vmatpush1.bf16.msra.mxu0 %v411
    %459 = vmatprep.subr.bf16.mxu0 0
    %460 = vmatpush2.bf16.msra.mxu0 0
    %461 = vmatprep.subr.bf16.mxu0 0
    %462 = vmatpush2.bf16.msra.mxu0 0
    %463 = vmatprep.subr.bf16.mxu0 0
    %464 = vmatpush2.bf16.msra.mxu0 0
    %465 = vmatprep.subr.bf16.mxu0 0
    %466 = vmatpush2.bf16.msra.mxu0 0
    %467 = vmatprep.subr.bf16.mxu0 0
    %468 = vmatpush2.bf16.msra.mxu0 0
    %469 = vmatprep.subr.bf16.mxu0 0
    %470 = vmatpush2.bf16.msra.mxu0 0
    %471 = vmatprep.subr.bf16.mxu0 0
    %472 = vmatpush2.bf16.msra.mxu0 0
    %473 = vmatprep.subr.bf16.mxu0 0
    %474 = vmatpush2.bf16.msra.mxu0 0
    %475 = vmatprep.mubr.bf16.mxu0 0
    %476 = vmatmul.mubr.bf16.gmra.mxu0 %v327
    %v477 = vpop.f32.mrf.mxu0
    %v478 = vadd.f32 %v356, %v477
    %v479 = vpop.f32.mrf.mxu0
    %v480 = vadd.f32 %v360, %v479
    %v481 = vpop.f32.mrf.mxu0
    %v482 = vadd.f32 %v356, %v481
    %v483 = vpop.f32.mrf.mxu0
    %v484 = vadd.f32 %v360, %v483
    %485 = vmatprep.mubr.bf16.mxu0 0
    %486 = vmatmul.mubr.bf16.gmra.mxu0 %v328
    %v487 = vpop.f32.mrf.mxu0
    %v488 = vadd.f32 %v356, %v487
    %v489 = vpop.f32.mrf.mxu0
    %v490 = vadd.f32 %v360, %v489
    %v491 = vpop.f32.mrf.mxu0
    %v492 = vadd.f32 %v356, %v491
    %v493 = vpop.f32.mrf.mxu0
    %v494 = vadd.f32 %v360, %v493
    %495 = vmatprep.mubr.bf16.mxu0 0
    %496 = vmatmul.mubr.bf16.gmra.mxu0 %v329
    %v497 = vpop.f32.mrf.mxu0
    %v498 = vadd.f32 %v356, %v497
    %v499 = vpop.f32.mrf.mxu0
    %v500 = vadd.f32 %v360, %v499
    %v501 = vpop.f32.mrf.mxu0
    %v502 = vadd.f32 %v356, %v501
    %v503 = vpop.f32.mrf.mxu0
    %v504 = vadd.f32 %v360, %v503
    %505 = vmatprep.mubr.bf16.mxu0 0
    %506 = vmatmul.mubr.bf16.gmra.mxu0 %v330
    %v507 = vpop.f32.mrf.mxu0
    %v508 = vadd.f32 %v356, %v507
    %v509 = vpop.f32.mrf.mxu0
    %v510 = vadd.f32 %v360, %v509
    %v511 = vpop.f32.mrf.mxu0
    %v512 = vadd.f32 %v356, %v511
    %v513 = vpop.f32.mrf.mxu0
    %v514 = vadd.f32 %v360, %v513
    %515 = vmatprep.mubr.bf16.mxu0 0
    %516 = vmatmul.mubr.bf16.gmra.mxu0 %v331
    %v517 = vpop.f32.mrf.mxu0
    %v518 = vadd.f32 %v356, %v517
    %v519 = vpop.f32.mrf.mxu0
    %v520 = vadd.f32 %v360, %v519
    %v521 = vpop.f32.mrf.mxu0
    %v522 = vadd.f32 %v356, %v521
    %v523 = vpop.f32.mrf.mxu0
    %v524 = vadd.f32 %v360, %v523
    %525 = vmatprep.mubr.bf16.mxu0 0
    %526 = vmatmul.mubr.bf16.gmra.mxu0 %v332
    %v527 = vpop.f32.mrf.mxu0
    %v528 = vadd.f32 %v356, %v527
    %v529 = vpop.f32.mrf.mxu0
    %v530 = vadd.f32 %v360, %v529
    %v531 = vpop.f32.mrf.mxu0
    %v532 = vadd.f32 %v356, %v531
    %v533 = vpop.f32.mrf.mxu0
    %v534 = vadd.f32 %v360, %v533
    %535 = vmatprep.mubr.bf16.mxu0 0
    %536 = vmatmul.mubr.bf16.gmra.mxu0 %v333
    %v537 = vpop.f32.mrf.mxu0
    %v538 = vadd.f32 %v356, %v537
    %v539 = vpop.f32.mrf.mxu0
    %v540 = vadd.f32 %v360, %v539
    %v541 = vpop.f32.mrf.mxu0
    %v542 = vadd.f32 %v356, %v541
    %v543 = vpop.f32.mrf.mxu0
    %v544 = vadd.f32 %v360, %v543
    %545 = vmatprep.mubr.bf16.mxu0 0
    %546 = vmatmul.mubr.bf16.gmra.mxu0 %v334
    %v547 = vpop.f32.mrf.mxu0
    %v548 = vadd.f32 %v356, %v547
    %v549 = vpop.f32.mrf.mxu0
    %v550 = vadd.f32 %v360, %v549
    %v551 = vpop.f32.mrf.mxu0
    %v552 = vadd.f32 %v356, %v551
    %v553 = vpop.f32.mrf.mxu0
    %v554 = vadd.f32 %v360, %v553
    %555 = vdwg.mxu0
    %v556 = vld [vmem:[#allocation5] sm:$0xff]
    %v557 = vld [vmem:[#allocation5 + $0x8] sm:$0xff]
    %v558 = vld [vmem:[#allocation5 + $0x10] sm:$0xff]
    %v559 = vld [vmem:[#allocation5 + $0x18] sm:$0xff]
    %v560 = vld [vmem:[#allocation5 + $0x20] sm:$0xff]
    %v561 = vld [vmem:[#allocation5 + $0x28] sm:$0xff]
    %v562 = vld [vmem:[#allocation5 + $0x30] sm:$0xff]
    %v563 = vld [vmem:[#allocation5 + $0x38] sm:$0xff]
    %v564 = vld [vmem:[#allocation5 + $0x40] sm:$0xff]
    %v565 = vld [vmem:[#allocation5 + $0x48] sm:$0xff]
    %v566 = vld [vmem:[#allocation5 + $0x50] sm:$0xff]
    %v567 = vld [vmem:[#allocation5 + $0x58] sm:$0xff]
    %v568 = vld [vmem:[#allocation5 + $0x60] sm:$0xff]
    %v569 = vld [vmem:[#allocation5 + $0x68] sm:$0xff]
    %v570 = vld [vmem:[#allocation5 + $0x70] sm:$0xff]
    %v571 = vld [vmem:[#allocation5 + $0x78] sm:$0xff]
    %v572 = vmul.f32 %v480, 0.5
    %v573 = vmul.f32 %v484, 0.5
    %v574 = vmul.f32 %v490, 0.5
    %v575 = vmul.f32 %v494, 0.5
    %v576 = vmul.f32 %v500, 0.5
    %v577 = vmul.f32 %v504, 0.5
    %v578 = vmul.f32 %v510, 0.5
    %v579 = vmul.f32 %v514, 0.5
    %v580 = vmul.f32 %v520, 0.5
    %v581 = vmul.f32 %v524, 0.5
    %v582 = vmul.f32 %v530, 0.5
    %v583 = vmul.f32 %v534, 0.5
    %v584 = vmul.f32 %v540, 0.5
    %v585 = vmul.f32 %v544, 0.5
    %v586 = vmul.f32 %v550, 0.5
    %v587 = vmul.f32 %v554, 0.5
    %v588 = vmul.f32 %v572, 1.442695
    %v589 = vpow.pop %v588
    %v590 = vmul.f32 %v573, 1.442695
    %v591 = vpow.pop %v590
    %v592 = vmul.f32 %v574, 1.442695
    %v593 = vpow.pop %v592
    %v594 = vmul.f32 %v575, 1.442695
    %v595 = vpow.pop %v594
    %v596 = vmul.f32 %v576, 1.442695
    %v597 = vpow.pop %v596
    %v598 = vmul.f32 %v577, 1.442695
    %v599 = vpow.pop %v598
    %v600 = vmul.f32 %v578, 1.442695
    %v601 = vpow.pop %v600
    %v602 = vmul.f32 %v579, 1.442695
    %v603 = vpow.pop %v602
    %v604 = vmul.f32 %v580, 1.442695
    %v605 = vpow.pop %v604
    %v606 = vmul.f32 %v581, 1.442695
    %v607 = vpow.pop %v606
    %v608 = vmul.f32 %v582, 1.442695
    %v609 = vpow.pop %v608
    %v610 = vmul.f32 %v583, 1.442695
    %v611 = vpow.pop %v610
    %v612 = vmul.f32 %v584, 1.442695
    %v613 = vpow.pop %v612
    %v614 = vmul.f32 %v585, 1.442695
    %v615 = vpow.pop %v614
    %v616 = vmul.f32 %v586, 1.442695
    %v617 = vpow.pop %v616
    %v618 = vmul.f32 %v587, 1.442695
    %v619 = vpow.pop %v618
    %v620 = vmul.f32 %v556, %v589
    %v621 = vmul.f32 %v557, %v591
    %v622 = vmul.f32 %v558, %v593
    %v623 = vmul.f32 %v559, %v595
    %v624 = vmul.f32 %v560, %v597
    %v625 = vmul.f32 %v561, %v599
    %v626 = vmul.f32 %v562, %v601
    %v627 = vmul.f32 %v563, %v603
    %v628 = vmul.f32 %v564, %v605
    %v629 = vmul.f32 %v565, %v607
    %v630 = vmul.f32 %v566, %v609
    %v631 = vmul.f32 %v567, %v611
    %v632 = vmul.f32 %v568, %v613
    %v633 = vmul.f32 %v569, %v615
    %v634 = vmul.f32 %v570, %v617
    %v635 = vmul.f32 %v571, %v619
    %v636 = vadd.f32 %v478, %v620
    %v637 = vadd.f32 %v482, %v621
    %v638 = vadd.f32 %v488, %v622
    %v639 = vadd.f32 %v492, %v623
    %v640 = vadd.f32 %v498, %v624
    %v641 = vadd.f32 %v502, %v625
    %v642 = vadd.f32 %v508, %v626
    %v643 = vadd.f32 %v512, %v627
    %v644 = vadd.f32 %v518, %v628
    %v645 = vadd.f32 %v522, %v629
    %v646 = vadd.f32 %v528, %v630
    %v647 = vadd.f32 %v532, %v631
    %v648 = vadd.f32 %v538, %v632
    %v649 = vadd.f32 %v542, %v633
    %v650 = vadd.f32 %v548, %v634
    %v651 = vadd.f32 %v552, %v635
    %v652 = vpack.c.bf16 %v637, %v636
    %v653 = vpack.c.bf16 %v639, %v638
    %v654 = vpack.c.bf16 %v641, %v640
    %v655 = vpack.c.bf16 %v643, %v642
    %v656 = vpack.c.bf16 %v645, %v644
    %v657 = vpack.c.bf16 %v647, %v646
    %v658 = vpack.c.bf16 %v649, %v648
    %v659 = vpack.c.bf16 %v651, %v650
    %v660 = vld [vmem:[#allocation10] sm:$0xf]
    %v661 = vld [vmem:[#allocation10 + $0x4] sm:$0xf]
    %v662 = vld [vmem:[#allocation10 + $0x8] sm:$0xf]
    %v663 = vld [vmem:[#allocation10 + $0xc] sm:$0xf]
    %v664 = vld [vmem:[#allocation10 + $0x10] sm:$0xf]
    %v665 = vld [vmem:[#allocation10 + $0x14] sm:$0xf]
    %v666 = vld [vmem:[#allocation10 + $0x18] sm:$0xf]
    %v667 = vld [vmem:[#allocation10 + $0x1c] sm:$0xf]
    %v668 = vld [vmem:[#allocation10 + $0x20] sm:$0xf]
    %v669 = vld [vmem:[#allocation10 + $0x24] sm:$0xf]
    %v670 = vld [vmem:[#allocation10 + $0x28] sm:$0xf]
    %v671 = vld [vmem:[#allocation10 + $0x2c] sm:$0xf]
    %v672 = vld [vmem:[#allocation10 + $0x30] sm:$0xf]
    %v673 = vld [vmem:[#allocation10 + $0x34] sm:$0xf]
    %v674 = vld [vmem:[#allocation10 + $0x38] sm:$0xf]
    %v675 = vld [vmem:[#allocation10 + $0x3c] sm:$0xf]
    %v676 = vld [vmem:[%s7] sm:$0x1]
    %v678 = vlaneseq
    %v679 = vshrl.u32 %v678, 7
    %v680 = vsub.s32 0, %v679
    %v681 = vrot.slane %v676, %v680
    %v699 = vunpack.c.l.b16 %v660
    %v700 = vunpack.c.l.b16 %v661
    %v701 = vunpack.c.l.b16 %v662
    %v702 = vunpack.c.l.b16 %v663
    %v703 = vunpack.c.l.b16 %v664
    %v704 = vunpack.c.l.b16 %v665
    %v705 = vunpack.c.l.b16 %v666
    %v706 = vunpack.c.l.b16 %v667
    %v707 = vunpack.c.l.b16 %v668
    %v708 = vunpack.c.l.b16 %v669
    %v709 = vunpack.c.l.b16 %v670
    %v710 = vunpack.c.l.b16 %v671
    %v711 = vunpack.c.l.b16 %v672
    %v712 = vunpack.c.l.b16 %v673
    %v713 = vunpack.c.l.b16 %v674
    %v714 = vunpack.c.l.b16 %v675
    %v715 = vpack.c.b16 %v700, %v699
    %v716 = vpack.c.b16 %v702, %v701
    %v717 = vpack.c.b16 %v704, %v703
    %v718 = vpack.c.b16 %v706, %v705
    %v719 = vpack.c.b16 %v708, %v707
    %v720 = vpack.c.b16 %v710, %v709
    %v721 = vpack.c.b16 %v712, %v711
    %v722 = vpack.c.b16 %v714, %v713
    %731 = vmatprep.subr.bf16.mxu0 0
    %732 = vmatpush1.bf16.msra.mxu0 %v722
    %733 = vmatprep.subr.bf16.mxu0 0
    %734 = vmatpush1.bf16.msra.mxu0 %v721
    %735 = vmatprep.subr.bf16.mxu0 0
    %736 = vmatpush1.bf16.msra.mxu0 %v720
    %737 = vmatprep.subr.bf16.mxu0 0
    %738 = vmatpush1.bf16.msra.mxu0 %v719
    %739 = vmatprep.subr.bf16.mxu0 0
    %740 = vmatpush1.bf16.msra.mxu0 %v718
    %741 = vmatprep.subr.bf16.mxu0 0
    %742 = vmatpush1.bf16.msra.mxu0 %v717
    %743 = vmatprep.subr.bf16.mxu0 0
    %744 = vmatpush1.bf16.msra.mxu0 %v716
    %745 = vmatprep.subr.bf16.mxu0 0
    %746 = vmatpush1.bf16.msra.mxu0 %v715
    %747 = vmatprep.subr.bf16.mxu0 0
    %748 = vmatpush2.bf16.msra.mxu0 0
    %749 = vmatprep.subr.bf16.mxu0 0
    %750 = vmatpush2.bf16.msra.mxu0 0
    %751 = vmatprep.subr.bf16.mxu0 0
    %752 = vmatpush2.bf16.msra.mxu0 0
    %753 = vmatprep.subr.bf16.mxu0 0
    %754 = vmatpush2.bf16.msra.mxu0 0
    %755 = vmatprep.subr.bf16.mxu0 0
    %756 = vmatpush2.bf16.msra.mxu0 0
    %757 = vmatprep.subr.bf16.mxu0 0
    %758 = vmatpush2.bf16.msra.mxu0 0
    %759 = vmatprep.subr.bf16.mxu0 0
    %760 = vmatpush2.bf16.msra.mxu0 0
    %761 = vmatprep.subr.bf16.mxu0 0
    %762 = vmatpush2.bf16.msra.mxu0 0
    %763 = vmatprep.mubr.bf16.mxu0 0
    %764 = vmatmul.mubr.bf16.gmra.mxu0 %v652
    %v765 = vpop.f32.mrf.mxu0
    %v766 = vadd.f32 %v681, %v765
    %v767 = vpop.f32.mrf.mxu0
    %v768 = vpop.f32.mrf.mxu0
    %v769 = vadd.f32 %v681, %v768
    %v770 = vpop.f32.mrf.mxu0
    %771 = vmatprep.mubr.bf16.mxu0 0
    %772 = vmatmul.mubr.bf16.gmra.mxu0 %v653
    %v773 = vpop.f32.mrf.mxu0
    %v774 = vadd.f32 %v681, %v773
    %v775 = vpop.f32.mrf.mxu0
    %v776 = vpop.f32.mrf.mxu0
    %v777 = vadd.f32 %v681, %v776
    %v778 = vpop.f32.mrf.mxu0
    %779 = vmatprep.mubr.bf16.mxu0 0
    %780 = vmatmul.mubr.bf16.gmra.mxu0 %v654
    %v781 = vpop.f32.mrf.mxu0
    %v782 = vadd.f32 %v681, %v781
    %v783 = vpop.f32.mrf.mxu0
    %v784 = vpop.f32.mrf.mxu0
    %v785 = vadd.f32 %v681, %v784
    %v786 = vpop.f32.mrf.mxu0
    %787 = vmatprep.mubr.bf16.mxu0 0
    %788 = vmatmul.mubr.bf16.gmra.mxu0 %v655
    %v789 = vpop.f32.mrf.mxu0
    %v790 = vadd.f32 %v681, %v789
    %v791 = vpop.f32.mrf.mxu0
    %v792 = vpop.f32.mrf.mxu0
    %v793 = vadd.f32 %v681, %v792
    %v794 = vpop.f32.mrf.mxu0
    %795 = vmatprep.mubr.bf16.mxu0 0
    %796 = vmatmul.mubr.bf16.gmra.mxu0 %v656
    %v797 = vpop.f32.mrf.mxu0
    %v798 = vadd.f32 %v681, %v797
    %v799 = vpop.f32.mrf.mxu0
    %v800 = vpop.f32.mrf.mxu0
    %v801 = vadd.f32 %v681, %v800
    %v802 = vpop.f32.mrf.mxu0
    %803 = vmatprep.mubr.bf16.mxu0 0
    %804 = vmatmul.mubr.bf16.gmra.mxu0 %v657
    %v805 = vpop.f32.mrf.mxu0
    %v806 = vadd.f32 %v681, %v805
    %v807 = vpop.f32.mrf.mxu0
    %v808 = vpop.f32.mrf.mxu0
    %v809 = vadd.f32 %v681, %v808
    %v810 = vpop.f32.mrf.mxu0
    %811 = vmatprep.mubr.bf16.mxu0 0
    %812 = vmatmul.mubr.bf16.gmra.mxu0 %v658
    %v813 = vpop.f32.mrf.mxu0
    %v814 = vadd.f32 %v681, %v813
    %v815 = vpop.f32.mrf.mxu0
    %v816 = vpop.f32.mrf.mxu0
    %v817 = vadd.f32 %v681, %v816
    %v818 = vpop.f32.mrf.mxu0
    %819 = vmatprep.mubr.bf16.mxu0 0
    %820 = vmatmul.mubr.bf16.gmra.mxu0 %v659
    %v821 = vpop.f32.mrf.mxu0
    %v822 = vadd.f32 %v681, %v821
    %v823 = vpop.f32.mrf.mxu0
    %v824 = vpop.f32.mrf.mxu0
    %v825 = vadd.f32 %v681, %v824
    %v826 = vpop.f32.mrf.mxu0
    %827 = vdwg.mxu0
    %v828 = vmax.f32 %v766, 0.0
    %v829 = vmax.f32 %v769, 0.0
    %v830 = vmax.f32 %v774, 0.0
    %v831 = vmax.f32 %v777, 0.0
    %v832 = vmax.f32 %v782, 0.0
    %v833 = vmax.f32 %v785, 0.0
    %v834 = vmax.f32 %v790, 0.0
    %v835 = vmax.f32 %v793, 0.0
    %v836 = vmax.f32 %v798, 0.0
    %v837 = vmax.f32 %v801, 0.0
    %v838 = vmax.f32 %v806, 0.0
    %v839 = vmax.f32 %v809, 0.0
    %v840 = vmax.f32 %v814, 0.0
    %v841 = vmax.f32 %v817, 0.0
    %v842 = vmax.f32 %v822, 0.0
    %v843 = vmax.f32 %v825, 0.0
    %v844 = vpack.c.bf16 %v829, %v828
    %v845 = vpack.c.bf16 %v831, %v830
    %v846 = vpack.c.bf16 %v833, %v832
    %v847 = vpack.c.bf16 %v835, %v834
    %v848 = vpack.c.bf16 %v837, %v836
    %v849 = vpack.c.bf16 %v839, %v838
    %v850 = vpack.c.bf16 %v841, %v840
    %v851 = vpack.c.bf16 %v843, %v842
    %v852 = vld [vmem:[#allocation11] sm:$0xf]
    %v853 = vld [vmem:[#allocation11 + $0x4] sm:$0xf]
    %v854 = vld [vmem:[#allocation11 + $0x8] sm:$0xf]
    %v855 = vld [vmem:[#allocation11 + $0xc] sm:$0xf]
    %v856 = vld [vmem:[#allocation11 + $0x10] sm:$0xf]
    %v857 = vld [vmem:[#allocation11 + $0x14] sm:$0xf]
    %v858 = vld [vmem:[#allocation11 + $0x18] sm:$0xf]
    %v859 = vld [vmem:[#allocation11 + $0x1c] sm:$0xf]
    %v860 = vld [vmem:[#allocation11 + $0x20] sm:$0xf]
    %v861 = vld [vmem:[#allocation11 + $0x24] sm:$0xf]
    %v862 = vld [vmem:[#allocation11 + $0x28] sm:$0xf]
    %v863 = vld [vmem:[#allocation11 + $0x2c] sm:$0xf]
    %v864 = vld [vmem:[#allocation11 + $0x30] sm:$0xf]
    %v865 = vld [vmem:[#allocation11 + $0x34] sm:$0xf]
    %v866 = vld [vmem:[#allocation11 + $0x38] sm:$0xf]
    %v867 = vld [vmem:[#allocation11 + $0x3c] sm:$0xf]
    %v868 = vld [vmem:[%s9] sm:$0x1]
    %v870 = vlaneseq
    %v871 = vshrl.u32 %v870, 7
    %v872 = vsub.s32 0, %v871
    %v873 = vrot.slane %v868, %v872
    %v891 = vunpack.c.l.b16 %v852
    %v892 = vunpack.c.l.b16 %v853
    %v893 = vunpack.c.l.b16 %v854
    %v894 = vunpack.c.l.b16 %v855
    %v895 = vunpack.c.l.b16 %v856
    %v896 = vunpack.c.l.b16 %v857
    %v897 = vunpack.c.l.b16 %v858
    %v898 = vunpack.c.l.b16 %v859
    %v899 = vunpack.c.l.b16 %v860
    %v900 = vunpack.c.l.b16 %v861
    %v901 = vunpack.c.l.b16 %v862
    %v902 = vunpack.c.l.b16 %v863
    %v903 = vunpack.c.l.b16 %v864
    %v904 = vunpack.c.l.b16 %v865
    %v905 = vunpack.c.l.b16 %v866
    %v906 = vunpack.c.l.b16 %v867
    %v907 = vpack.c.b16 %v892, %v891
    %v908 = vpack.c.b16 %v894, %v893
    %v909 = vpack.c.b16 %v896, %v895
    %v910 = vpack.c.b16 %v898, %v897
    %v911 = vpack.c.b16 %v900, %v899
    %v912 = vpack.c.b16 %v902, %v901
    %v913 = vpack.c.b16 %v904, %v903
    %v914 = vpack.c.b16 %v906, %v905
    %923 = vmatprep.subr.bf16.mxu0 0
    %924 = vmatpush1.bf16.msra.mxu0 %v914
    %925 = vmatprep.subr.bf16.mxu0 0
    %926 = vmatpush1.bf16.msra.mxu0 %v913
    %927 = vmatprep.subr.bf16.mxu0 0
    %928 = vmatpush1.bf16.msra.mxu0 %v912
    %929 = vmatprep.subr.bf16.mxu0 0
    %930 = vmatpush1.bf16.msra.mxu0 %v911
    %931 = vmatprep.subr.bf16.mxu0 0
    %932 = vmatpush1.bf16.msra.mxu0 %v910
    %933 = vmatprep.subr.bf16.mxu0 0
    %934 = vmatpush1.bf16.msra.mxu0 %v909
    %935 = vmatprep.subr.bf16.mxu0 0
    %936 = vmatpush1.bf16.msra.mxu0 %v908
    %937 = vmatprep.subr.bf16.mxu0 0
    %938 = vmatpush1.bf16.msra.mxu0 %v907
    %939 = vmatprep.subr.bf16.mxu0 0
    %940 = vmatpush2.bf16.msra.mxu0 0
    %941 = vmatprep.subr.bf16.mxu0 0
    %942 = vmatpush2.bf16.msra.mxu0 0
    %943 = vmatprep.subr.bf16.mxu0 0
    %944 = vmatpush2.bf16.msra.mxu0 0
    %945 = vmatprep.subr.bf16.mxu0 0
    %946 = vmatpush2.bf16.msra.mxu0 0
    %947 = vmatprep.subr.bf16.mxu0 0
    %948 = vmatpush2.bf16.msra.mxu0 0
    %949 = vmatprep.subr.bf16.mxu0 0
    %950 = vmatpush2.bf16.msra.mxu0 0
    %951 = vmatprep.subr.bf16.mxu0 0
    %952 = vmatpush2.bf16.msra.mxu0 0
    %953 = vmatprep.subr.bf16.mxu0 0
    %954 = vmatpush2.bf16.msra.mxu0 0
    %955 = vmatprep.mubr.bf16.mxu0 0
    %956 = vmatmul.mubr.bf16.gmra.mxu0 %v844
    %v957 = vpop.f32.mrf.mxu0
    %v958 = vadd.f32 %v873, %v957
    %v959 = vpop.f32.mrf.mxu0
    %v960 = vpop.f32.mrf.mxu0
    %v961 = vadd.f32 %v873, %v960
    %v962 = vpop.f32.mrf.mxu0
    %963 = vmatprep.mubr.bf16.mxu0 0
    %964 = vmatmul.mubr.bf16.gmra.mxu0 %v845
    %v965 = vpop.f32.mrf.mxu0
    %v966 = vadd.f32 %v873, %v965
    %v967 = vpop.f32.mrf.mxu0
    %v968 = vpop.f32.mrf.mxu0
    %v969 = vadd.f32 %v873, %v968
    %v970 = vpop.f32.mrf.mxu0
    %971 = vmatprep.mubr.bf16.mxu0 0
    %972 = vmatmul.mubr.bf16.gmra.mxu0 %v846
    %v973 = vpop.f32.mrf.mxu0
    %v974 = vadd.f32 %v873, %v973
    %v975 = vpop.f32.mrf.mxu0
    %v976 = vpop.f32.mrf.mxu0
    %v977 = vadd.f32 %v873, %v976
    %v978 = vpop.f32.mrf.mxu0
    %979 = vmatprep.mubr.bf16.mxu0 0
    %980 = vmatmul.mubr.bf16.gmra.mxu0 %v847
    %v981 = vpop.f32.mrf.mxu0
    %v982 = vadd.f32 %v873, %v981
    %v983 = vpop.f32.mrf.mxu0
    %v984 = vpop.f32.mrf.mxu0
    %v985 = vadd.f32 %v873, %v984
    %v986 = vpop.f32.mrf.mxu0
    %987 = vmatprep.mubr.bf16.mxu0 0
    %988 = vmatmul.mubr.bf16.gmra.mxu0 %v848
    %v989 = vpop.f32.mrf.mxu0
    %v990 = vadd.f32 %v873, %v989
    %v991 = vpop.f32.mrf.mxu0
    %v992 = vpop.f32.mrf.mxu0
    %v993 = vadd.f32 %v873, %v992
    %v994 = vpop.f32.mrf.mxu0
    %995 = vmatprep.mubr.bf16.mxu0 0
    %996 = vmatmul.mubr.bf16.gmra.mxu0 %v849
    %v997 = vpop.f32.mrf.mxu0
    %v998 = vadd.f32 %v873, %v997
    %v999 = vpop.f32.mrf.mxu0
    %v1000 = vpop.f32.mrf.mxu0
    %v1001 = vadd.f32 %v873, %v1000
    %v1002 = vpop.f32.mrf.mxu0
    %1003 = vmatprep.mubr.bf16.mxu0 0
    %1004 = vmatmul.mubr.bf16.gmra.mxu0 %v850
    %v1005 = vpop.f32.mrf.mxu0
    %v1006 = vadd.f32 %v873, %v1005
    %v1007 = vpop.f32.mrf.mxu0
    %v1008 = vpop.f32.mrf.mxu0
    %v1009 = vadd.f32 %v873, %v1008
    %v1010 = vpop.f32.mrf.mxu0
    %1011 = vmatprep.mubr.bf16.mxu0 0
    %1012 = vmatmul.mubr.bf16.gmra.mxu0 %v851
    %v1013 = vpop.f32.mrf.mxu0
    %v1014 = vadd.f32 %v873, %v1013
    %v1015 = vpop.f32.mrf.mxu0
    %v1016 = vpop.f32.mrf.mxu0
    %v1017 = vadd.f32 %v873, %v1016
    %v1018 = vpop.f32.mrf.mxu0
    %1019 = vdwg.mxu0
    %v1020 = vxor.u32 %v958, 2147483648
    %v1021 = vxor.u32 %v961, 2147483648
    %v1022 = vxor.u32 %v966, 2147483648
    %v1023 = vxor.u32 %v969, 2147483648
    %v1024 = vxor.u32 %v974, 2147483648
    %v1025 = vxor.u32 %v977, 2147483648
    %v1026 = vxor.u32 %v982, 2147483648
    %v1027 = vxor.u32 %v985, 2147483648
    %v1028 = vxor.u32 %v990, 2147483648
    %v1029 = vxor.u32 %v993, 2147483648
    %v1030 = vxor.u32 %v998, 2147483648
    %v1031 = vxor.u32 %v1001, 2147483648
    %v1032 = vxor.u32 %v1006, 2147483648
    %v1033 = vxor.u32 %v1009, 2147483648
    %v1034 = vxor.u32 %v1014, 2147483648
    %v1035 = vxor.u32 %v1017, 2147483648
    %v1036 = vmul.f32 %v1020, 1.442695
    %v1037 = vpow.pop %v1036
    %v1038 = vmul.f32 %v1021, 1.442695
    %v1039 = vpow.pop %v1038
    %v1040 = vmul.f32 %v1022, 1.442695
    %v1041 = vpow.pop %v1040
    %v1042 = vmul.f32 %v1023, 1.442695
    %v1043 = vpow.pop %v1042
    %v1044 = vmul.f32 %v1024, 1.442695
    %v1045 = vpow.pop %v1044
    %v1046 = vmul.f32 %v1025, 1.442695
    %v1047 = vpow.pop %v1046
    %v1048 = vmul.f32 %v1026, 1.442695
    %v1049 = vpow.pop %v1048
    %v1050 = vmul.f32 %v1027, 1.442695
    %v1051 = vpow.pop %v1050
    %v1052 = vmul.f32 %v1028, 1.442695
    %v1053 = vpow.pop %v1052
    %v1054 = vmul.f32 %v1029, 1.442695
    %v1055 = vpow.pop %v1054
    %v1056 = vmul.f32 %v1030, 1.442695
    %v1057 = vpow.pop %v1056
    %v1058 = vmul.f32 %v1031, 1.442695
    %v1059 = vpow.pop %v1058
    %v1060 = vmul.f32 %v1032, 1.442695
    %v1061 = vpow.pop %v1060
    %v1062 = vmul.f32 %v1033, 1.442695
    %v1063 = vpow.pop %v1062
    %v1064 = vmul.f32 %v1034, 1.442695
    %v1065 = vpow.pop %v1064
    %v1066 = vmul.f32 %v1035, 1.442695
    %v1067 = vpow.pop %v1066
    %v1068 = vadd.f32 %v1037, 1.0
    %v1069 = vadd.f32 %v1039, 1.0
    %v1070 = vadd.f32 %v1041, 1.0
    %v1071 = vadd.f32 %v1043, 1.0
    %v1072 = vadd.f32 %v1045, 1.0
    %v1073 = vadd.f32 %v1047, 1.0
    %v1074 = vadd.f32 %v1049, 1.0
    %v1075 = vadd.f32 %v1051, 1.0
    %v1076 = vadd.f32 %v1053, 1.0
    %v1077 = vadd.f32 %v1055, 1.0
    %v1078 = vadd.f32 %v1057, 1.0
    %v1079 = vadd.f32 %v1059, 1.0
    %v1080 = vadd.f32 %v1061, 1.0
    %v1081 = vadd.f32 %v1063, 1.0
    %v1082 = vadd.f32 %v1065, 1.0
    %v1083 = vadd.f32 %v1067, 1.0
    %v1084 = vrcp.pop %v1068
    %v1085 = vmul.f32 1.0, %v1084
    %v1086 = vrcp.pop %v1069
    %v1087 = vmul.f32 1.0, %v1086
    %v1088 = vrcp.pop %v1070
    %v1089 = vmul.f32 1.0, %v1088
    %v1090 = vrcp.pop %v1071
    %v1091 = vmul.f32 1.0, %v1090
    %v1092 = vrcp.pop %v1072
    %v1093 = vmul.f32 1.0, %v1092
    %v1094 = vrcp.pop %v1073
    %v1095 = vmul.f32 1.0, %v1094
    %v1096 = vrcp.pop %v1074
    %v1097 = vmul.f32 1.0, %v1096
    %v1098 = vrcp.pop %v1075
    %v1099 = vmul.f32 1.0, %v1098
    %v1100 = vrcp.pop %v1076
    %v1101 = vmul.f32 1.0, %v1100
    %v1102 = vrcp.pop %v1077
    %v1103 = vmul.f32 1.0, %v1102
    %v1104 = vrcp.pop %v1078
    %v1105 = vmul.f32 1.0, %v1104
    %v1106 = vrcp.pop %v1079
    %v1107 = vmul.f32 1.0, %v1106
    %v1108 = vrcp.pop %v1080
    %v1109 = vmul.f32 1.0, %v1108
    %v1110 = vrcp.pop %v1081
    %v1111 = vmul.f32 1.0, %v1110
    %v1112 = vrcp.pop %v1082
    %v1113 = vmul.f32 1.0, %v1112
    %v1114 = vrcp.pop %v1083
    %v1115 = vmul.f32 1.0, %v1114
    %1116 = vst [vmem:[#allocation13] sm:$0xff] %v1085
    %1117 = vst [vmem:[#allocation13 + $0x8] sm:$0xff] %v1087
    %1118 = vst [vmem:[#allocation13 + $0x10] sm:$0xff] %v1089
    %1119 = vst [vmem:[#allocation13 + $0x18] sm:$0xff] %v1091
    %1120 = vst [vmem:[#allocation13 + $0x20] sm:$0xff] %v1093
    %1121 = vst [vmem:[#allocation13 + $0x28] sm:$0xff] %v1095
    %1122 = vst [vmem:[#allocation13 + $0x30] sm:$0xff] %v1097
    %1123 = vst [vmem:[#allocation13 + $0x38] sm:$0xff] %v1099
    %1124 = vst [vmem:[#allocation13 + $0x40] sm:$0xff] %v1101
    %1125 = vst [vmem:[#allocation13 + $0x48] sm:$0xff] %v1103
    %1126 = vst [vmem:[#allocation13 + $0x50] sm:$0xff] %v1105
    %1127 = vst [vmem:[#allocation13 + $0x58] sm:$0xff] %v1107
    %1128 = vst [vmem:[#allocation13 + $0x60] sm:$0xff] %v1109
    %1129 = vst [vmem:[#allocation13 + $0x68] sm:$0xff] %v1111
    %1130 = vst [vmem:[#allocation13 + $0x70] sm:$0xff] %v1113
    %1131 = vst [vmem:[#allocation13 + $0x78] sm:$0xff] %v1115
    // Predicated region
    $region66: #{tpu_custom_call.1} parent=1 // pred_check
      _
    $region67: #{tpu_custom_call.1} parent=1 // pred_check_branch
      %1133 = sbr.rel (0) target = $region69
    $region68: #{tpu_custom_call.1} parent=1 // pred_region
      %s1135 = ssub.s32 2048, 2048
      %1136 = vsyncadd [#allocation4], %s1135
      %s1137 = sshll.u32 [#allocation13], 4
      %s1138 = int_to_ptr.vmem [resolvable:$true] %s1137
      %1143 = dma.vmem_to_hbm [thread:$0]  %s1138, 2048, %s10, [#allocation4], 128, 128, 8
    $region69: #{tpu_custom_call.1} parent=1 // pred_fallthru
      _
    // Predicated region
    $region70: #{tpu_custom_call.1} parent=1 // pred_check
      _
    $region71: #{tpu_custom_call.1} parent=1 // pred_check_branch
      %1145 = sbr.rel (0) target = $region73
    $region72: #{tpu_custom_call.1} parent=1 // pred_region
      %1146 = dma.done [#allocation4], 2048
    $region73: #{tpu_custom_call.1} parent=1 // pred_fallthru
      _
    %1147 = vsyncpa [#allocation3], 1
    %1148 = vsyncpa [#allocation6], 1
    %1149 = vsyncpa [#allocation9], 1
    %1150 = vsyncpa [#allocation12], 1
    %1151 = vsyncpa [#allocation4], 1

</llo_original>
